<compile_context>
chip_gen: v6e
topology: v6e:2x2x1
jax: 0.10.0
libtpu: 0.0.40
codegen_flags: <defaults>
</compile_context>

<pallas_src>
import functools
import math

import jax
import jax.numpy as jnp
from jax import lax
from jax.experimental import pallas as pl
from jax.experimental.pallas import tpu as pltpu


def _embed_kernel(ids_ref, emb_ref, pe_ref, out_ref, *, scale, batch):
    """Produce one (block_tokens, D) output tile.

    ids_ref: (block_tokens, 1) int32  -- per-tile flat token ids (g = s*B + b)
    emb_ref: (V, D) float             -- VMEM-resident embedding table
    pe_ref:  (block_s, D) float       -- per-tile positional-encoding rows
    out_ref: (block_tokens, D) float  -- lane/sublane-dense output slab
    """
    block_tokens, _ = out_ref.shape
    vocab = emb_ref.shape[0]
    block_s = pe_ref.shape[0]

    # --- token gather as a scaled one-hot MXU matmul -------------------------
    ids = ids_ref[...]                                               # (bt, 1)
    tok_iota = lax.broadcasted_iota(jnp.int32, (block_tokens, vocab), 1)
    tok_oh = jnp.where(ids == tok_iota, scale, 0.0).astype(emb_ref.dtype)
    out = jnp.dot(
        tok_oh, emb_ref[...],
        preferred_element_type=jnp.float32,
        precision=lax.Precision.HIGHEST)                             # (bt, D)

    # --- PE gather: local pos = t // batch, expressed as a one-hot matmul ----
    row = lax.broadcasted_iota(jnp.int32, (block_tokens, block_s), 0)
    col = lax.broadcasted_iota(jnp.int32, (block_tokens, block_s), 1)
    in_range = (row >= col * batch) & (row < (col + 1) * batch)      # row//batch == col
    pos_oh = jnp.where(in_range, 1.0, 0.0).astype(pe_ref.dtype)
    out = out + jnp.dot(
        pos_oh, pe_ref[...],
        preferred_element_type=jnp.float32,
        precision=lax.Precision.HIGHEST)                             # (bt, D)

    out_ref[...] = out.astype(out_ref.dtype)


def _pick_block_s(S, B, max_tokens=2048):
    """Largest divisor of S giving block_tokens = d*B <= max_tokens, preferring
    8-aligned block_tokens (dense (8,128) output tiles)."""
    divisors = [d for d in range(1, S + 1) if S % d == 0]
    good = [d for d in divisors if d * B <= max_tokens and (d * B) % 8 == 0]
    if good:
        return max(good)
    ok = [d for d in divisors if d * B <= max_tokens]
    return max(ok) if ok else S


def transformer_embedding(ids, emb_table, pe, *, block_s=None):
    """ids: (S, B) int32; emb_table: (V, D) float; pe: (max_len, D) float.

    Returns (S, B, D) = emb_table[ids] * sqrt(D) + pe[:S][:, None, :].
    """
    S, B = ids.shape
    V, D = emb_table.shape
    scale = math.sqrt(D)
    N = S * B

    if block_s is None:
        block_s = _pick_block_s(S, B)
    assert S % block_s == 0, "block_s must divide S"
    block_tokens = block_s * B
    assert block_tokens % 8 == 0 or block_tokens == N, (
        "block_s * B must be a multiple of 8 (or cover all tokens)")
    num_tiles = S // block_s

    # Flat, row-major token ids as a column: row g = s*B + b.
    ids_col = ids.reshape(N, 1).astype(jnp.int32)
    pe_used = pe[:S]                              # matches self.pe[:x.size(0)]

    # VMEM budget: resident table (double-buffered by the pipeline), per-tile
    # pe / ids / out blocks (double-buffered), one-hot intermediates, headroom.
    elt = jnp.dtype(emb_table.dtype).itemsize
    needed = (2 * elt * (V * D + block_s * D + block_tokens * D)
              + 2 * 4 * block_tokens
              + 4 * block_tokens * (V + block_s)
              + (4 << 20))
    try:
        cap = int(getattr(pltpu.get_tpu_info(), "vmem_capacity_bytes",
                          64 * 1024 * 1024))
    except Exception:
        cap = 64 * 1024 * 1024                   # conservative (v7x per-TC)
    vmem_limit = int(min(max(needed, 32 * 1024 * 1024), cap - 8 * 1024 * 1024))

    grid_spec = pltpu.PrefetchScalarGridSpec(
        num_scalar_prefetch=0,
        grid=(num_tiles,),
        in_specs=[
            # Per-tile token-id column (pipelined like any other input).
            pl.BlockSpec((block_tokens, 1), lambda i: (i, 0)),
            # Whole embedding table; constant index map -> fetched once,
            # VMEM-resident across all grid steps.
            pl.BlockSpec((V, D), lambda i: (0, 0)),
            # Per-tile positional-encoding rows (S*D total HBM traffic).
            pl.BlockSpec((block_s, D), lambda i: (i, 0)),
        ],
        out_specs=pl.BlockSpec((block_tokens, D), lambda i: (i, 0)),
    )

    out_flat = pl.pallas_call(
        functools.partial(_embed_kernel, scale=scale, batch=B),
        grid_spec=grid_spec,
        out_shape=jax.ShapeDtypeStruct((N, D), emb_table.dtype),
        compiler_params=pltpu.CompilerParams(
            dimension_semantics=("parallel",),
            vmem_limit_bytes=vmem_limit,
        ),
    )(ids_col, emb_table, pe_used)

    # (N, D) -> (S, B, D): contiguous, metadata-only reshape.
    return out_flat.reshape(S, B, D)


def make_positional_encoding(max_len, d_model):
    """Matches PositionalEncoding.__init__ (buffer pe, squeezed to (max_len, D))."""
    position = jnp.arange(max_len, dtype=jnp.float32)[:, None]
    div_term = jnp.exp(
        jnp.arange(0, d_model, 2, dtype=jnp.float32)
        * (-math.log(10000.0) / d_model))
    pe = jnp.zeros((max_len, d_model), dtype=jnp.float32)
    pe = pe.at[:, 0::2].set(jnp.sin(position * div_term))
    pe = pe.at[:, 1::2].set(jnp.cos(position * div_term))
    return pe


if __name__ == "__main__":
    vocab_size = 64
    embedding_size = 128   # D: multiple of 128 -> lane-dense output blocks
    seq_len = 16           # S
    batch = 2              # B
    max_len = 64           # small stand-in for 5000; only rows [:S] are used
    block_s = 8            # 8 seq rows * B tokens per tile -> grid = (2,), even

    key = jax.random.PRNGKey(0)
    k_emb, k_ids = jax.random.split(key)

    # Deterministic parameter init (nn.Embedding weight ~ N(0, 1)).
    emb_table = jax.random.normal(
        k_emb, (vocab_size, embedding_size), dtype=jnp.float32)
    pe = make_positional_encoding(max_len, embedding_size)

    x = jax.random.randint(k_ids, (seq_len, batch), 0, vocab_size, dtype=jnp.int32)

    out = transformer_embedding(x, emb_table, pe, block_s=block_s)
    out = jax.block_until_ready(out)

    # Pure-JAX reference of the PyTorch forward.
    ref = emb_table[x] * math.sqrt(embedding_size) + pe[:seq_len][:, None, :]
    assert out.shape == (seq_len, batch, embedding_size)
    assert jnp.allclose(out, ref, atol=1e-4, rtol=1e-4)

    print("KERNEL_OK")
</pallas_src>

<mosaic_0001>
module attributes {stable_mosaic.version = 11 : i64} {
  func.func @_embed_kernel(%arg0: i32, %arg1: memref<16x1xi32, #tpu.memory_space<vmem>>, %arg2: memref<64x128xf32, #tpu.memory_space<vmem>>, %arg3: memref<8x128xf32, #tpu.memory_space<vmem>>, %arg4: memref<16x128xf32, #tpu.memory_space<vmem>>) attributes {dimension_semantics = [#tpu.dimension_semantics<parallel>], iteration_bounds = array<i64: 2>, scalar_prefetch = 0 : i64, scratch_operands = 0 : i64, tpu.core_type = #tpu.core_type<tc>, window_params = [{transform_indices = @transform_0, window_bounds = array<i64: 16, 1>}, {pipeline_mode = #tpu.pipeline_mode<synchronous>, transform_indices = @transform_1, window_bounds = array<i64: 64, 128>}, {transform_indices = @transform_2, window_bounds = array<i64: 8, 128>}, {transform_indices = @transform_3, window_bounds = array<i64: 16, 128>}]} {
    %c0 = arith.constant 0 : index
    %c0_0 = arith.constant 0 : index
    %0 = vector.load %arg1[%c0, %c0_0] : memref<16x1xi32, #tpu.memory_space<vmem>>, vector<16x1xi32>
    %1 = tpu.iota {dimensions = array<i32: 1>} : vector<16x64xi32>
    %2 = vector.broadcast %0 : vector<16x1xi32> to vector<16x64xi32>
    %3 = arith.cmpi eq, %2, %1 : vector<16x64xi32>
    %cst = arith.constant 11.3137083 : f32
    %cst_1 = arith.constant 0.000000e+00 : f32
    %4 = vector.broadcast %cst : f32 to vector<16x64xf32>
    %5 = vector.broadcast %cst_1 : f32 to vector<16x64xf32>
    %6 = arith.select %3, %4, %5 : vector<16x64xi1>, vector<16x64xf32>
    %c0_2 = arith.constant 0 : index
    %c0_3 = arith.constant 0 : index
    %7 = vector.load %arg2[%c0_2, %c0_3] : memref<64x128xf32, #tpu.memory_space<vmem>>, vector<64x128xf32>
    %cst_4 = arith.constant dense<0.000000e+00> : vector<16x128xf32>
    %8 = tpu.matmul %6, %7, %cst_4 {dimension_numbers = #tpu.dot_dimension_numbers<[1], [0], [0], [1], [0, 0, 1, 1], [], []>, precision = #tpu.contract_precision<fp32>} : vector<16x64xf32>, vector<64x128xf32>, vector<16x128xf32> -> vector<16x128xf32>
    %9 = tpu.iota {dimensions = array<i32: 0>} : vector<16x8xi32>
    %10 = tpu.iota {dimensions = array<i32: 1>} : vector<16x8xi32>
    %c2_i32 = arith.constant 2 : i32
    %11 = vector.broadcast %c2_i32 : i32 to vector<16x8xi32>
    %12 = arith.muli %10, %11 : vector<16x8xi32>
    %13 = arith.cmpi sge, %9, %12 : vector<16x8xi32>
    %c1_i32 = arith.constant 1 : i32
    %14 = vector.broadcast %c1_i32 : i32 to vector<16x8xi32>
    %15 = arith.addi %10, %14 : vector<16x8xi32>
    %c2_i32_5 = arith.constant 2 : i32
    %16 = vector.broadcast %c2_i32_5 : i32 to vector<16x8xi32>
    %17 = arith.muli %15, %16 : vector<16x8xi32>
    %18 = arith.cmpi slt, %9, %17 : vector<16x8xi32>
    %19 = arith.andi %13, %18 : vector<16x8xi1>
    %cst_6 = arith.constant 1.000000e+00 : f32
    %cst_7 = arith.constant 0.000000e+00 : f32
    %20 = vector.broadcast %cst_6 : f32 to vector<16x8xf32>
    %21 = vector.broadcast %cst_7 : f32 to vector<16x8xf32>
    %22 = arith.select %19, %20, %21 : vector<16x8xi1>, vector<16x8xf32>
    %c0_8 = arith.constant 0 : index
    %c0_9 = arith.constant 0 : index
    %23 = vector.load %arg3[%c0_8, %c0_9] : memref<8x128xf32, #tpu.memory_space<vmem>>, vector<8x128xf32>
    %cst_10 = arith.constant dense<0.000000e+00> : vector<16x128xf32>
    %24 = tpu.matmul %22, %23, %cst_10 {dimension_numbers = #tpu.dot_dimension_numbers<[1], [0], [0], [1], [0, 0, 1, 1], [], []>, precision = #tpu.contract_precision<fp32>} : vector<16x8xf32>, vector<8x128xf32>, vector<16x128xf32> -> vector<16x128xf32>
    %25 = arith.addf %8, %24 : vector<16x128xf32>
    %c0_11 = arith.constant 0 : index
    %c0_12 = arith.constant 0 : index
    %26 = vector.load %arg4[%c0_11, %c0_12] : memref<16x128xf32, #tpu.memory_space<vmem>>, vector<16x128xf32>
    tpu.vector_store %arg4[%c0_11, %c0_12], %25 {strides = array<i32>} : memref<16x128xf32, #tpu.memory_space<vmem>>, vector<16x128xf32>,
    return
  }
  func.func @transform_0(%arg0: i32) -> (i32, i32) {
    %c0_i32 = arith.constant 0 : i32
    %c0_i32_0 = arith.constant 0 : i32
    return %arg0, %c0_i32 : i32, i32
  }
  func.func @transform_1(%arg0: i32) -> (i32, i32) {
    %c0_i32 = arith.constant 0 : i32
    %c0_i32_0 = arith.constant 0 : i32
    %c0_i32_1 = arith.constant 0 : i32
    return %c0_i32, %c0_i32_0 : i32, i32
  }
  func.func @transform_2(%arg0: i32) -> (i32, i32) {
    %c0_i32 = arith.constant 0 : i32
    %c0_i32_0 = arith.constant 0 : i32
    return %arg0, %c0_i32 : i32, i32
  }
  func.func @transform_3(%arg0: i32) -> (i32, i32) {
    %c0_i32 = arith.constant 0 : i32
    %c0_i32_0 = arith.constant 0 : i32
    return %arg0, %c0_i32 : i32, i32
  }
}

</mosaic_0001>

<llo_original>
// kernel: tpu_custom_call.1
$region0: #{tpu_custom_call.1}
  #allocation0 [shape = 'u32[]', space=smem, size = 0x4, offset = 0x4, fixed_abs, tag = 'smem constant byte address 0x4 - core index']
  #allocation1 [shape = 'u32[144,128]{1,0:T(1,128)}', space=vmem, size = 0x12000, scoped, tag = 'internal scratch']
  %s0 = inlined_call_operand.vmem [shape: s32[32,1], index: 0, kind: input, shape index: {}]
  %s1 = inlined_call_operand.hbm [shape: f32[64,128], index: 1, kind: input, shape index: {}]
  %s2 = inlined_call_operand.vmem [shape: f32[16,128], index: 2, kind: input, shape index: {}]
  %s3 = inlined_call_operand.hbm [shape: f32[32,128], index: 3, kind: output, shape index: {}]
  %s4 = sld [smem:[#allocation0]]
  $region49: #{tpu_custom_call.1} parent=0
    _
  %s6 = ssub.s32 1, %s4
  %s7 = scalar_select 0, %s6, %s4
  $region1: #{tpu_custom_call.1} parent=0
    #allocation2 [shape = 'u8[32768]{0}', space=vmem, size = 0x8000, scoped, tag = 'input window, operand 1, single buffered']
    #allocation3 [shape = 's32[2]{0}', space=sflag, size = 0x8, scoped, tag = 'scoped memory for tpu_custom_call.1']
    #allocation4 [shape = 's32[2]{0}', space=sflag, size = 0x8, scoped, tag = 'scoped memory for tpu_custom_call.1']
    #allocation5 [shape = 'u8[16384]{0}', space=vmem, size = 0x4000, scoped, tag = 'output window, operand 0']
    %8 = vsyncpa [#allocation3], 0
    %9 = vsyncpa [#allocation4], 0
    %s10 = scalar_lea.sflag [#allocation4], 1
    %11 = vsyncpa %s10, 0
    loop: start=0, step=1, limit=4
    $region2: #{tpu_custom_call.1} parent=1 // loop_pre_header
      _
    $region3: #{tpu_custom_call.1} parent=1 // loop_header
      %s13 = sphi 0, %s17
      %p14 = scmp.ge.s32.totalorder %s13, 4
      %s23 = sphi 0, %s25
      %s26 = sphi 0, %s23
      %s27 = sphi 0, %s26
      %s43 = sphi 0, %s27
      %s47 = sphi 0, %s47
      %s49 = sphi 0, %s47
      %s50 = sphi 0, %s49
      %s64 = sphi 0, %s50
      %s70 = sphi 0, %s72
      %s73 = sphi 0, %s70
      %s74 = sphi 0, %s73
      %s90 = sphi 0, %s74
      %s96 = sphi 0, %s98
      %s99 = sphi 0, %s96
      %s100 = sphi 0, %s99
      %s116 = sphi 0, %s100
    $region4: #{tpu_custom_call.1} parent=1 // loop_header_branch
      %16 = sbr.rel (%p14) target = $region8
    $region5: #{tpu_custom_call.1} parent=1 // loop_body
      %s18 = ssub.s32 %s13, 1
      %s19 = ssub.s32 %s13, 2
      %s20 = sadd.s32 %s13, 1
      %s21 = ssub.s32 %s13, %s20
      %p22 = scmp.eq.s32.totalorder %s21, 0
      %s24 = sadd.s32 %s23, 1
      %s25 = scalar_select %p22, %s23, %s24
      %p28 = pneg %p22
      %p29 = scmp.eq.s32.totalorder %s13, 1
      %p30 = por %p28, %p29
      %p31 = scmp.ne.s32.totalorder %s23, %s26
      %p32 = scmp.eq.s32.totalorder %s13, 0
      %p33 = por %p31, %p32
      %p34 = scmp.ne.s32.totalorder %s23, %s26
      %p35 = scmp.eq.s32.totalorder %s18, 1
      %p36 = por %p34, %p35
      %p37 = scmp.ne.s32.totalorder %s26, %s27
      %p38 = scmp.eq.s32.totalorder %s18, 0
      %p39 = por %p37, %p38
      %p40 = scmp.ne.s32.totalorder %s26, %s27
      %p41 = scmp.eq.s32.totalorder %s19, 1
      %p42 = por %p40, %p41
      %p44 = scmp.ne.s32.totalorder %s27, %s43
      %p45 = scmp.eq.s32.totalorder %s19, 0
      %p46 = por %p44, %p45
      %s48 = sadd.s32 %s47, 1
      %p51 = scmp.eq.s32.totalorder %s13, 1
      %p52 = scmp.ne.s32.totalorder %s47, %s49
      %p53 = scmp.eq.s32.totalorder %s13, 0
      %p54 = por %p52, %p53
      %p55 = scmp.ne.s32.totalorder %s47, %s49
      %p56 = scmp.eq.s32.totalorder %s18, 1
      %p57 = por %p55, %p56
      %p58 = scmp.ne.s32.totalorder %s49, %s50
      %p59 = scmp.eq.s32.totalorder %s18, 0
      %p60 = por %p58, %p59
      %p61 = scmp.ne.s32.totalorder %s49, %s50
      %p62 = scmp.eq.s32.totalorder %s19, 1
      %p63 = por %p61, %p62
      %p65 = scmp.ne.s32.totalorder %s50, %s64
      %p66 = scmp.eq.s32.totalorder %s19, 0
      %p67 = por %p65, %p66
      %s68 = ssub.s32 %s13, %s20
      %p69 = scmp.eq.s32.totalorder %s68, 0
      %s71 = sadd.s32 %s70, 1
      %s72 = scalar_select %p69, %s70, %s71
      %p75 = pneg %p69
      %p76 = scmp.eq.s32.totalorder %s13, 1
      %p77 = por %p75, %p76
      %p78 = scmp.ne.s32.totalorder %s70, %s73
      %p79 = scmp.eq.s32.totalorder %s13, 0
      %p80 = por %p78, %p79
      %p81 = scmp.ne.s32.totalorder %s70, %s73
      %p82 = scmp.eq.s32.totalorder %s18, 1
      %p83 = por %p81, %p82
      %p84 = scmp.ne.s32.totalorder %s73, %s74
      %p85 = scmp.eq.s32.totalorder %s18, 0
      %p86 = por %p84, %p85
      %p87 = scmp.ne.s32.totalorder %s73, %s74
      %p88 = scmp.eq.s32.totalorder %s19, 1
      %p89 = por %p87, %p88
      %p91 = scmp.ne.s32.totalorder %s74, %s90
      %p92 = scmp.eq.s32.totalorder %s19, 0
      %p93 = por %p91, %p92
      %s94 = ssub.s32 %s13, %s20
      %p95 = scmp.eq.s32.totalorder %s94, 0
      %s97 = sadd.s32 %s96, 1
      %s98 = scalar_select %p95, %s96, %s97
      %p101 = pneg %p95
      %p102 = scmp.eq.s32.totalorder %s13, 1
      %p103 = por %p101, %p102
      %p104 = scmp.ne.s32.totalorder %s96, %s99
      %p105 = scmp.eq.s32.totalorder %s13, 0
      %p106 = por %p104, %p105
      %p107 = scmp.ne.s32.totalorder %s96, %s99
      %p108 = scmp.eq.s32.totalorder %s18, 1
      %p109 = por %p107, %p108
      %p110 = scmp.ne.s32.totalorder %s99, %s100
      %p111 = scmp.eq.s32.totalorder %s18, 0
      %p112 = por %p110, %p111
      %p113 = scmp.ne.s32.totalorder %s99, %s100
      %p114 = scmp.eq.s32.totalorder %s19, 1
      %p115 = por %p113, %p114
      %p117 = scmp.ne.s32.totalorder %s100, %s116
      %p118 = scmp.eq.s32.totalorder %s19, 0
      %p119 = por %p117, %p118
      %p120 = scmp.le.s32.totalorder 1, %s13
      %p121 = scmp.lt.s32.totalorder %s13, 3
      %p122 = pnand %p120, %p121
      %p123 = pneg %p122
      // Predicated region
      $region9: #{tpu_custom_call.1} parent=5 // pred_check
        _
      $region10: #{tpu_custom_call.1} parent=5 // pred_check_branch
        %125 = sbr.rel (%p122) target = $region12
      $region11: #{tpu_custom_call.1} parent=5 // pred_region
        %s126 = ssub.s32 %s13, 1
        // Predicated region
        $region13: #{tpu_custom_call.1} parent=11 // pred_check
          %p127 = pneg %p60
        $region14: #{tpu_custom_call.1} parent=11 // pred_check_branch
          %129 = sbr.rel (%p127) target = $region16
        $region15: #{tpu_custom_call.1} parent=11 // pred_region
          %s131 = ssub.s32 1024, 1024
          %132 = vsyncadd [#allocation3], %s131
          %s133 = sshll.u32 [#allocation2], 4
          %s134 = int_to_ptr.vmem [resolvable:$true] %s133
          %139 = dma.hbm_to_vmem [thread:$0]  %s1, 1024, %s134, [#allocation3], 128, 128, 8
        $region16: #{tpu_custom_call.1} parent=11 // pred_fallthru
          _
      $region12: #{tpu_custom_call.1} parent=5 // pred_fallthru
        _
      %p140 = scmp.lt.s32.totalorder %s13, 2
      // Predicated region
      $region17: #{tpu_custom_call.1} parent=5 // pred_check
        %p141 = pneg %p140
      $region18: #{tpu_custom_call.1} parent=5 // pred_check_branch
        %143 = sbr.rel (%p141) target = $region20
      $region19: #{tpu_custom_call.1} parent=5 // pred_region
        // Predicated region
        $region21: #{tpu_custom_call.1} parent=19 // pred_check
          %p144 = pneg %p33
        $region22: #{tpu_custom_call.1} parent=19 // pred_check_branch
          %146 = sbr.rel (%p144) target = $region24
        $region23: #{tpu_custom_call.1} parent=19 // pred_region
          %s147 = smul.u32 2, %s13
          %p148 = scmp.lt.s32.totalorder %s147, 3
          %s149 = scalar_select %p148, %s147, 3
          %s150 = smul.addr %s149, 8
          %s151 = scalar_lea.vmem %s0, %s150
          %s152 = smul.u32 2, %s13
        $region24: #{tpu_custom_call.1} parent=19 // pred_fallthru
          _
        // Predicated region
        $region25: #{tpu_custom_call.1} parent=19 // pred_check
          %p153 = pneg %p80
        $region26: #{tpu_custom_call.1} parent=19 // pred_check_branch
          %155 = sbr.rel (%p153) target = $region28
        $region27: #{tpu_custom_call.1} parent=19 // pred_region
          %p156 = scmp.lt.s32.totalorder %s13, 1
          %s157 = scalar_select %p156, %s13, 1
          %s158 = smul.addr %s157, 8
          %s159 = scalar_lea.vmem %s2, %s158
        $region28: #{tpu_custom_call.1} parent=19 // pred_fallthru
          _
      $region20: #{tpu_custom_call.1} parent=5 // pred_fallthru
        _
      %p160 = scmp.le.s32.totalorder 1, %s13
      %p161 = scmp.lt.s32.totalorder %s13, 3
      %p162 = pnand %p160, %p161
      %p163 = pneg %p162
      // Predicated region
      $region29: #{tpu_custom_call.1} parent=5 // pred_check
        _
      $region30: #{tpu_custom_call.1} parent=5 // pred_check_branch
        %165 = sbr.rel (%p162) target = $region32
      $region31: #{tpu_custom_call.1} parent=5 // pred_region
        %s166 = ssub.s32 %s13, 1
        // Predicated region
        $region33: #{tpu_custom_call.1} parent=31 // pred_check
          %p167 = pneg %p60
        $region34: #{tpu_custom_call.1} parent=31 // pred_check_branch
          %169 = sbr.rel (%p167) target = $region36
        $region35: #{tpu_custom_call.1} parent=31 // pred_region
          %170 = dma.done [#allocation3], 1024
        $region36: #{tpu_custom_call.1} parent=31 // pred_fallthru
          _
        %s171 = smul.u32 2, %s18
        %p172 = scmp.lt.s32.totalorder %s171, 3
        %s173 = scalar_select %p172, %s171, 3
        %s174 = smul.addr %s173, 8
        %s175 = scalar_lea.vmem %s0, %s174
        %p176 = pneg %p39
        %p177 = pneg %p36
        %p178 = pneg %p60
        %p179 = pneg %p57
        %p180 = scmp.lt.s32.totalorder %s18, 1
        %s181 = scalar_select %p180, %s18, 1
        %s182 = smul.addr %s181, 8
        %s183 = scalar_lea.vmem %s2, %s182
        %p184 = pneg %p86
        %p185 = pneg %p83
        %p186 = pneg %p112
        %p187 = pneg %p109
        %s188 = sand.u32 %s99, 1
        %s189 = scalar_lea.sflag [#allocation4], %s188
        %s190 = sand.u32 %s99, 1
        %s191 = smul.addr %s190, 16
        %s192 = scalar_lea.vmem [#allocation5], %s191
        %s193 = smul.u32 2, %s18
        %p194 = scmp.lt.s32.totalorder %s193, 3
        %s195 = scalar_select %p194, %s193, 3
        %s196 = smul.addr %s195, 8
        %s197 = scalar_lea.vmem %s0, %s196
        %s198 = smul.u32 2, %s18
        %p199 = scmp.lt.s32.totalorder %s18, 1
        %s200 = scalar_select %p199, %s18, 1
        %s201 = smul.addr %s200, 8
        %s202 = scalar_lea.vmem %s2, %s201
        %s203 = smul.u32 2, %s18
        %v204 = vld [vmem:[%s197] sm:$0xff]
        %v205 = vld [vmem:[%s197 + $0x8] sm:$0xff]
        %v206 = vlaneseq
        %v207 = vand.u32 %v206, 127
        %208 = vset.pattern.permute.xlu0 0
        %209 = vperm.xlu0 %208, %v204
        %v210 = vpop.permute.xlu0 %209
        %211 = vset.pattern.permute.xlu0 0
        %212 = vperm.xlu0 %211, %v205
        %v213 = vpop.permute.xlu0 %212
        %vm214 = vcmp.eq.s32.totalorder %v210, %v207
        %vm215 = vcmp.eq.s32.totalorder %v213, %v207
        %v216 = vsel %vm214, 11.313708, 0.0
        %v217 = vsel %vm215, 11.313708, 0.0
        %v218 = vld [vmem:[#allocation2] sm:$0xff]
        %v219 = vld [vmem:[#allocation2 + $0x8] sm:$0xff]
        %v220 = vld [vmem:[#allocation2 + $0x10] sm:$0xff]
        %v221 = vld [vmem:[#allocation2 + $0x18] sm:$0xff]
        %v222 = vld [vmem:[#allocation2 + $0x20] sm:$0xff]
        %v223 = vld [vmem:[#allocation2 + $0x28] sm:$0xff]
        %v224 = vld [vmem:[#allocation2 + $0x30] sm:$0xff]
        %v225 = vld [vmem:[#allocation2 + $0x38] sm:$0xff]
        %v226 = vlaneseq
        %v227 = vshrl.u32 %v226, 7
        %v228 = vadd.s32 %v227, 8
        %v229 = vmul.u32 %v207, 2
        %vm230 = vcmp.ge.s32.totalorder %v227, %v229
        %vm231 = vcmp.ge.s32.totalorder %v228, %v229
        %v232 = vadd.s32 %v207, 1
        %v233 = vmul.u32 %v232, 2
        %vm234 = vcmp.lt.s32.totalorder %v227, %v233
        %vm235 = vcmp.lt.s32.totalorder %v228, %v233
        %vm236 = vmand %vm230, %vm234
        %vm237 = vmand %vm231, %vm235
        %v238 = vsel %vm236, 1.0, 0.0
        %v239 = vsel %vm237, 1.0, 0.0
        %v240 = vld [vmem:[%s202] sm:$0xff]
        %vm241 = vcmask 64512
        %v243 = vsel %vm241, %v238, 0
        %v246 = vsel %vm241, %v239, 0
        %248 = vmatprep.subr.mxu0 0.0
        %249 = vmatpush1.msra.mxu0 0.0
        %250 = vmatprep.subr.mxu0 0.0
        %251 = vmatpush1.msra.mxu0 0.0
        %252 = vmatprep.subr.mxu0 0.0
        %253 = vmatpush1.msra.mxu0 0.0
        %254 = vmatprep.subr.mxu0 0.0
        %255 = vmatpush1.msra.mxu0 0.0
        %256 = vmatprep.subr.mxu0 0.0
        %257 = vmatpush1.msra.mxu0 0.0
        %258 = vmatprep.subr.mxu0 0.0
        %259 = vmatpush1.msra.mxu0 0.0
        %260 = vmatprep.subr.mxu0 0.0
        %261 = vmatpush1.msra.mxu0 0.0
        %262 = vmatprep.subr.mxu0 0.0
        %263 = vmatpush1.msra.mxu0 0.0
        %264 = vmatprep.subr.mxu0 0.0
        %265 = vmatpush1.msra.mxu0 0.0
        %266 = vmatprep.subr.mxu0 0.0
        %267 = vmatpush1.msra.mxu0 0.0
        %268 = vmatprep.subr.mxu0 0.0
        %269 = vmatpush1.msra.mxu0 0.0
        %270 = vmatprep.subr.mxu0 0.0
        %271 = vmatpush1.msra.mxu0 0.0
        %272 = vmatprep.subr.mxu0 0.0
        %273 = vmatpush1.msra.mxu0 0.0
        %274 = vmatprep.subr.mxu0 0.0
        %275 = vmatpush1.msra.mxu0 0.0
        %276 = vmatprep.subr.mxu0 0.0
        %277 = vmatpush1.msra.mxu0 0.0
        %278 = vmatprep.subr.mxu0 0.0
        %v279 = vand.u32 %v240, 4294901760
        %280 = vmatpush1.msra.mxu0 %v279
        %281 = vmatprep.subr.mxu0 0.0
        %282 = vmatpush2.msra.mxu0 0.0
        %283 = vmatprep.subr.mxu0 0.0
        %284 = vmatpush2.msra.mxu0 0.0
        %285 = vmatprep.subr.mxu0 0.0
        %286 = vmatpush2.msra.mxu0 0.0
        %287 = vmatprep.subr.mxu0 0.0
        %288 = vmatpush2.msra.mxu0 0.0
        %289 = vmatprep.subr.mxu0 0.0
        %290 = vmatpush2.msra.mxu0 0.0
        %291 = vmatprep.subr.mxu0 0.0
        %292 = vmatpush2.msra.mxu0 0.0
        %293 = vmatprep.subr.mxu0 0.0
        %294 = vmatpush2.msra.mxu0 0.0
        %295 = vmatprep.subr.mxu0 0.0
        %296 = vmatpush2.msra.mxu0 0.0
        %297 = vmatprep.subr.mxu0 0.0
        %298 = vmatpush2.msra.mxu0 0.0
        %299 = vmatprep.subr.mxu0 0.0
        %300 = vmatpush2.msra.mxu0 0.0
        %301 = vmatprep.subr.mxu0 0.0
        %302 = vmatpush2.msra.mxu0 0.0
        %303 = vmatprep.subr.mxu0 0.0
        %304 = vmatpush2.msra.mxu0 0.0
        %305 = vmatprep.subr.mxu0 0.0
        %306 = vmatpush2.msra.mxu0 0.0
        %307 = vmatprep.subr.mxu0 0.0
        %308 = vmatpush2.msra.mxu0 0.0
        %309 = vmatprep.subr.mxu0 0.0
        %310 = vmatpush2.msra.mxu0 0.0
        %311 = vmatprep.subr.mxu0 0.0
        %312 = vmatpush2.msra.mxu0 0.0
        %313 = vmatprep.mubr.f32.mxu0 0.0
        %v314 = vand.u32 %v243, 4294901760
        %v315 = vsub.f32 %v243, %v314
        %v316 = vand.u32 %v315, 4294901760
        %v317 = vsub.f32 %v315, %v316
        %v318 = vand.u32 %v317, 4294901760
        %319 = vmatmul.mubr.f32.gmra.mxu0 %v318
        %v320 = vpop.f32.mrf.mxu0
        %v321 = vadd.f32 0.0, %v320
        %v322 = vpop.f32.mrf.mxu0
        %323 = vmatprep.mubr.f32.mxu0 0.0
        %v324 = vand.u32 %v246, 4294901760
        %v325 = vsub.f32 %v246, %v324
        %v326 = vand.u32 %v325, 4294901760
        %v327 = vsub.f32 %v325, %v326
        %v328 = vand.u32 %v327, 4294901760
        %329 = vmatmul.mubr.f32.gmra.mxu0 %v328
        %v330 = vpop.f32.mrf.mxu0
        %v331 = vadd.f32 0.0, %v330
        %v332 = vpop.f32.mrf.mxu0
        %333 = vdwg.mxu0
        %334 = vmatprep.subr.mxu0 0.0
        %335 = vmatpush1.msra.mxu0 0.0
        %336 = vmatprep.subr.mxu0 0.0
        %337 = vmatpush1.msra.mxu0 0.0
        %338 = vmatprep.subr.mxu0 0.0
        %339 = vmatpush1.msra.mxu0 0.0
        %340 = vmatprep.subr.mxu0 0.0
        %341 = vmatpush1.msra.mxu0 0.0
        %342 = vmatprep.subr.mxu0 0.0
        %343 = vmatpush1.msra.mxu0 0.0
        %344 = vmatprep.subr.mxu0 0.0
        %345 = vmatpush1.msra.mxu0 0.0
        %346 = vmatprep.subr.mxu0 0.0
        %347 = vmatpush1.msra.mxu0 0.0
        %348 = vmatprep.subr.mxu0 0.0
        %349 = vmatpush1.msra.mxu0 0.0
        %350 = vmatprep.subr.mxu0 0.0
        %351 = vmatpush1.msra.mxu0 0.0
        %352 = vmatprep.subr.mxu0 0.0
        %353 = vmatpush1.msra.mxu0 0.0
        %354 = vmatprep.subr.mxu0 0.0
        %355 = vmatpush1.msra.mxu0 0.0
        %356 = vmatprep.subr.mxu0 0.0
        %357 = vmatpush1.msra.mxu0 0.0
        %358 = vmatprep.subr.mxu0 0.0
        %359 = vmatpush1.msra.mxu0 0.0
        %360 = vmatprep.subr.mxu0 0.0
        %361 = vmatpush1.msra.mxu0 0.0
        %362 = vmatprep.subr.mxu0 0.0
        %363 = vmatpush1.msra.mxu0 0.0
        %364 = vmatprep.subr.mxu0 0.0
        %v365 = vand.u32 %v240, 4294901760
        %v366 = vsub.f32 %v240, %v365
        %v367 = vand.u32 %v366, 4294901760
        %v368 = vsub.f32 %v366, %v367
        %v369 = vand.u32 %v368, 4294901760
        %370 = vmatpush1.msra.mxu0 %v369
        %371 = vmatprep.subr.mxu0 0.0
        %372 = vmatpush2.msra.mxu0 0.0
        %373 = vmatprep.subr.mxu0 0.0
        %374 = vmatpush2.msra.mxu0 0.0
        %375 = vmatprep.subr.mxu0 0.0
        %376 = vmatpush2.msra.mxu0 0.0
        %377 = vmatprep.subr.mxu0 0.0
        %378 = vmatpush2.msra.mxu0 0.0
        %379 = vmatprep.subr.mxu0 0.0
        %380 = vmatpush2.msra.mxu0 0.0
        %381 = vmatprep.subr.mxu0 0.0
        %382 = vmatpush2.msra.mxu0 0.0
        %383 = vmatprep.subr.mxu0 0.0
        %384 = vmatpush2.msra.mxu0 0.0
        %385 = vmatprep.subr.mxu0 0.0
        %386 = vmatpush2.msra.mxu0 0.0
        %387 = vmatprep.subr.mxu0 0.0
        %388 = vmatpush2.msra.mxu0 0.0
        %389 = vmatprep.subr.mxu0 0.0
        %390 = vmatpush2.msra.mxu0 0.0
        %391 = vmatprep.subr.mxu0 0.0
        %392 = vmatpush2.msra.mxu0 0.0
        %393 = vmatprep.subr.mxu0 0.0
        %394 = vmatpush2.msra.mxu0 0.0
        %395 = vmatprep.subr.mxu0 0.0
        %396 = vmatpush2.msra.mxu0 0.0
        %397 = vmatprep.subr.mxu0 0.0
        %398 = vmatpush2.msra.mxu0 0.0
        %399 = vmatprep.subr.mxu0 0.0
        %400 = vmatpush2.msra.mxu0 0.0
        %401 = vmatprep.subr.mxu0 0.0
        %402 = vmatpush2.msra.mxu0 0.0
        %403 = vmatprep.mubr.f32.mxu0 0.0
        %v404 = vand.u32 %v243, 4294901760
        %405 = vmatmul.mubr.f32.gmra.mxu0 %v404
        %v406 = vpop.f32.mrf.mxu0
        %v407 = vadd.f32 %v321, %v406
        %v408 = vpop.f32.mrf.mxu0
        %409 = vmatprep.mubr.f32.mxu0 0.0
        %v410 = vand.u32 %v246, 4294901760
        %411 = vmatmul.mubr.f32.gmra.mxu0 %v410
        %v412 = vpop.f32.mrf.mxu0
        %v413 = vadd.f32 %v331, %v412
        %v414 = vpop.f32.mrf.mxu0
        %415 = vdwg.mxu0
        %416 = vmatprep.subr.mxu0 0.0
        %417 = vmatpush1.msra.mxu0 0.0
        %418 = vmatprep.subr.mxu0 0.0
        %419 = vmatpush1.msra.mxu0 0.0
        %420 = vmatprep.subr.mxu0 0.0
        %421 = vmatpush1.msra.mxu0 0.0
        %422 = vmatprep.subr.mxu0 0.0
        %423 = vmatpush1.msra.mxu0 0.0
        %424 = vmatprep.subr.mxu0 0.0
        %425 = vmatpush1.msra.mxu0 0.0
        %426 = vmatprep.subr.mxu0 0.0
        %427 = vmatpush1.msra.mxu0 0.0
        %428 = vmatprep.subr.mxu0 0.0
        %429 = vmatpush1.msra.mxu0 0.0
        %430 = vmatprep.subr.mxu0 0.0
        %431 = vmatpush1.msra.mxu0 0.0
        %432 = vmatprep.subr.mxu0 0.0
        %433 = vmatpush1.msra.mxu0 0.0
        %434 = vmatprep.subr.mxu0 0.0
        %435 = vmatpush1.msra.mxu0 0.0
        %436 = vmatprep.subr.mxu0 0.0
        %437 = vmatpush1.msra.mxu0 0.0
        %438 = vmatprep.subr.mxu0 0.0
        %439 = vmatpush1.msra.mxu0 0.0
        %440 = vmatprep.subr.mxu0 0.0
        %441 = vmatpush1.msra.mxu0 0.0
        %442 = vmatprep.subr.mxu0 0.0
        %443 = vmatpush1.msra.mxu0 0.0
        %444 = vmatprep.subr.mxu0 0.0
        %445 = vmatpush1.msra.mxu0 0.0
        %446 = vmatprep.subr.mxu0 0.0
        %v447 = vand.u32 %v240, 4294901760
        %v448 = vsub.f32 %v240, %v447
        %449 = vmatpush1.msra.mxu0 %v448
        %450 = vmatprep.subr.mxu0 0.0
        %451 = vmatpush2.msra.mxu0 0.0
        %452 = vmatprep.subr.mxu0 0.0
        %453 = vmatpush2.msra.mxu0 0.0
        %454 = vmatprep.subr.mxu0 0.0
        %455 = vmatpush2.msra.mxu0 0.0
        %456 = vmatprep.subr.mxu0 0.0
        %457 = vmatpush2.msra.mxu0 0.0
        %458 = vmatprep.subr.mxu0 0.0
        %459 = vmatpush2.msra.mxu0 0.0
        %460 = vmatprep.subr.mxu0 0.0
        %461 = vmatpush2.msra.mxu0 0.0
        %462 = vmatprep.subr.mxu0 0.0
        %463 = vmatpush2.msra.mxu0 0.0
        %464 = vmatprep.subr.mxu0 0.0
        %465 = vmatpush2.msra.mxu0 0.0
        %466 = vmatprep.subr.mxu0 0.0
        %467 = vmatpush2.msra.mxu0 0.0
        %468 = vmatprep.subr.mxu0 0.0
        %469 = vmatpush2.msra.mxu0 0.0
        %470 = vmatprep.subr.mxu0 0.0
        %471 = vmatpush2.msra.mxu0 0.0
        %472 = vmatprep.subr.mxu0 0.0
        %473 = vmatpush2.msra.mxu0 0.0
        %474 = vmatprep.subr.mxu0 0.0
        %475 = vmatpush2.msra.mxu0 0.0
        %476 = vmatprep.subr.mxu0 0.0
        %477 = vmatpush2.msra.mxu0 0.0
        %478 = vmatprep.subr.mxu0 0.0
        %479 = vmatpush2.msra.mxu0 0.0
        %480 = vmatprep.subr.mxu0 0.0
        %481 = vmatpush2.msra.mxu0 0.0
        %482 = vmatprep.mubr.f32.mxu0 0.0
        %v483 = vand.u32 %v243, 4294901760
        %v484 = vsub.f32 %v243, %v483
        %485 = vmatmul.mubr.f32.gmra.mxu0 %v484
        %v486 = vpop.f32.mrf.mxu0
        %v487 = vadd.f32 %v407, %v486
        %v488 = vpop.f32.mrf.mxu0
        %489 = vmatprep.mubr.f32.mxu0 0.0
        %v490 = vand.u32 %v246, 4294901760
        %v491 = vsub.f32 %v246, %v490
        %492 = vmatmul.mubr.f32.gmra.mxu0 %v491
        %v493 = vpop.f32.mrf.mxu0
        %v494 = vadd.f32 %v413, %v493
        %v495 = vpop.f32.mrf.mxu0
        %496 = vdwg.mxu0
        %497 = vmatprep.subr.mxu0 0.0
        %498 = vmatpush1.msra.mxu0 0.0
        %499 = vmatprep.subr.mxu0 0.0
        %500 = vmatpush1.msra.mxu0 0.0
        %501 = vmatprep.subr.mxu0 0.0
        %502 = vmatpush1.msra.mxu0 0.0
        %503 = vmatprep.subr.mxu0 0.0
        %504 = vmatpush1.msra.mxu0 0.0
        %505 = vmatprep.subr.mxu0 0.0
        %506 = vmatpush1.msra.mxu0 0.0
        %507 = vmatprep.subr.mxu0 0.0
        %508 = vmatpush1.msra.mxu0 0.0
        %509 = vmatprep.subr.mxu0 0.0
        %510 = vmatpush1.msra.mxu0 0.0
        %511 = vmatprep.subr.mxu0 0.0
        %512 = vmatpush1.msra.mxu0 0.0
        %513 = vmatprep.subr.mxu0 0.0
        %514 = vmatpush1.msra.mxu0 0.0
        %515 = vmatprep.subr.mxu0 0.0
        %516 = vmatpush1.msra.mxu0 0.0
        %517 = vmatprep.subr.mxu0 0.0
        %518 = vmatpush1.msra.mxu0 0.0
        %519 = vmatprep.subr.mxu0 0.0
        %520 = vmatpush1.msra.mxu0 0.0
        %521 = vmatprep.subr.mxu0 0.0
        %522 = vmatpush1.msra.mxu0 0.0
        %523 = vmatprep.subr.mxu0 0.0
        %524 = vmatpush1.msra.mxu0 0.0
        %525 = vmatprep.subr.mxu0 0.0
        %526 = vmatpush1.msra.mxu0 0.0
        %527 = vmatprep.subr.mxu0 0.0
        %v528 = vand.u32 %v240, 4294901760
        %529 = vmatpush1.msra.mxu0 %v528
        %530 = vmatprep.subr.mxu0 0.0
        %531 = vmatpush2.msra.mxu0 0.0
        %532 = vmatprep.subr.mxu0 0.0
        %533 = vmatpush2.msra.mxu0 0.0
        %534 = vmatprep.subr.mxu0 0.0
        %535 = vmatpush2.msra.mxu0 0.0
        %536 = vmatprep.subr.mxu0 0.0
        %537 = vmatpush2.msra.mxu0 0.0
        %538 = vmatprep.subr.mxu0 0.0
        %539 = vmatpush2.msra.mxu0 0.0
        %540 = vmatprep.subr.mxu0 0.0
        %541 = vmatpush2.msra.mxu0 0.0
        %542 = vmatprep.subr.mxu0 0.0
        %543 = vmatpush2.msra.mxu0 0.0
        %544 = vmatprep.subr.mxu0 0.0
        %545 = vmatpush2.msra.mxu0 0.0
        %546 = vmatprep.subr.mxu0 0.0
        %547 = vmatpush2.msra.mxu0 0.0
        %548 = vmatprep.subr.mxu0 0.0
        %549 = vmatpush2.msra.mxu0 0.0
        %550 = vmatprep.subr.mxu0 0.0
        %551 = vmatpush2.msra.mxu0 0.0
        %552 = vmatprep.subr.mxu0 0.0
        %553 = vmatpush2.msra.mxu0 0.0
        %554 = vmatprep.subr.mxu0 0.0
        %555 = vmatpush2.msra.mxu0 0.0
        %556 = vmatprep.subr.mxu0 0.0
        %557 = vmatpush2.msra.mxu0 0.0
        %558 = vmatprep.subr.mxu0 0.0
        %559 = vmatpush2.msra.mxu0 0.0
        %560 = vmatprep.subr.mxu0 0.0
        %561 = vmatpush2.msra.mxu0 0.0
        %562 = vmatprep.mubr.f32.mxu0 0.0
        %v563 = vand.u32 %v243, 4294901760
        %v564 = vsub.f32 %v243, %v563
        %v565 = vand.u32 %v564, 4294901760
        %566 = vmatmul.mubr.f32.gmra.mxu0 %v565
        %v567 = vpop.f32.mrf.mxu0
        %v568 = vadd.f32 %v487, %v567
        %v569 = vpop.f32.mrf.mxu0
        %570 = vmatprep.mubr.f32.mxu0 0.0
        %v571 = vand.u32 %v246, 4294901760
        %v572 = vsub.f32 %v246, %v571
        %v573 = vand.u32 %v572, 4294901760
        %574 = vmatmul.mubr.f32.gmra.mxu0 %v573
        %v575 = vpop.f32.mrf.mxu0
        %v576 = vadd.f32 %v494, %v575
        %v577 = vpop.f32.mrf.mxu0
        %578 = vdwg.mxu0
        %579 = vmatprep.subr.mxu0 0.0
        %580 = vmatpush1.msra.mxu0 0.0
        %581 = vmatprep.subr.mxu0 0.0
        %582 = vmatpush1.msra.mxu0 0.0
        %583 = vmatprep.subr.mxu0 0.0
        %584 = vmatpush1.msra.mxu0 0.0
        %585 = vmatprep.subr.mxu0 0.0
        %586 = vmatpush1.msra.mxu0 0.0
        %587 = vmatprep.subr.mxu0 0.0
        %588 = vmatpush1.msra.mxu0 0.0
        %589 = vmatprep.subr.mxu0 0.0
        %590 = vmatpush1.msra.mxu0 0.0
        %591 = vmatprep.subr.mxu0 0.0
        %592 = vmatpush1.msra.mxu0 0.0
        %593 = vmatprep.subr.mxu0 0.0
        %594 = vmatpush1.msra.mxu0 0.0
        %595 = vmatprep.subr.mxu0 0.0
        %596 = vmatpush1.msra.mxu0 0.0
        %597 = vmatprep.subr.mxu0 0.0
        %598 = vmatpush1.msra.mxu0 0.0
        %599 = vmatprep.subr.mxu0 0.0
        %600 = vmatpush1.msra.mxu0 0.0
        %601 = vmatprep.subr.mxu0 0.0
        %602 = vmatpush1.msra.mxu0 0.0
        %603 = vmatprep.subr.mxu0 0.0
        %604 = vmatpush1.msra.mxu0 0.0
        %605 = vmatprep.subr.mxu0 0.0
        %606 = vmatpush1.msra.mxu0 0.0
        %607 = vmatprep.subr.mxu0 0.0
        %608 = vmatpush1.msra.mxu0 0.0
        %609 = vmatprep.subr.mxu0 0.0
        %v610 = vand.u32 %v240, 4294901760
        %v611 = vsub.f32 %v240, %v610
        %v612 = vand.u32 %v611, 4294901760
        %613 = vmatpush1.msra.mxu0 %v612
        %614 = vmatprep.subr.mxu0 0.0
        %615 = vmatpush2.msra.mxu0 0.0
        %616 = vmatprep.subr.mxu0 0.0
        %617 = vmatpush2.msra.mxu0 0.0
        %618 = vmatprep.subr.mxu0 0.0
        %619 = vmatpush2.msra.mxu0 0.0
        %620 = vmatprep.subr.mxu0 0.0
        %621 = vmatpush2.msra.mxu0 0.0
        %622 = vmatprep.subr.mxu0 0.0
        %623 = vmatpush2.msra.mxu0 0.0
        %624 = vmatprep.subr.mxu0 0.0
        %625 = vmatpush2.msra.mxu0 0.0
        %626 = vmatprep.subr.mxu0 0.0
        %627 = vmatpush2.msra.mxu0 0.0
        %628 = vmatprep.subr.mxu0 0.0
        %629 = vmatpush2.msra.mxu0 0.0
        %630 = vmatprep.subr.mxu0 0.0
        %631 = vmatpush2.msra.mxu0 0.0
        %632 = vmatprep.subr.mxu0 0.0
        %633 = vmatpush2.msra.mxu0 0.0
        %634 = vmatprep.subr.mxu0 0.0
        %635 = vmatpush2.msra.mxu0 0.0
        %636 = vmatprep.subr.mxu0 0.0
        %637 = vmatpush2.msra.mxu0 0.0
        %638 = vmatprep.subr.mxu0 0.0
        %639 = vmatpush2.msra.mxu0 0.0
        %640 = vmatprep.subr.mxu0 0.0
        %641 = vmatpush2.msra.mxu0 0.0
        %642 = vmatprep.subr.mxu0 0.0
        %643 = vmatpush2.msra.mxu0 0.0
        %644 = vmatprep.subr.mxu0 0.0
        %645 = vmatpush2.msra.mxu0 0.0
        %646 = vmatprep.mubr.f32.mxu0 0.0
        %v647 = vand.u32 %v243, 4294901760
        %648 = vmatmul.mubr.f32.gmra.mxu0 %v647
        %v649 = vpop.f32.mrf.mxu0
        %v650 = vadd.f32 %v568, %v649
        %v651 = vpop.f32.mrf.mxu0
        %652 = vmatprep.mubr.f32.mxu0 0.0
        %v653 = vand.u32 %v246, 4294901760
        %654 = vmatmul.mubr.f32.gmra.mxu0 %v653
        %v655 = vpop.f32.mrf.mxu0
        %v656 = vadd.f32 %v576, %v655
        %v657 = vpop.f32.mrf.mxu0
        %658 = vdwg.mxu0
        %659 = vmatprep.subr.mxu0 0.0
        %660 = vmatpush1.msra.mxu0 0.0
        %661 = vmatprep.subr.mxu0 0.0
        %662 = vmatpush1.msra.mxu0 0.0
        %663 = vmatprep.subr.mxu0 0.0
        %664 = vmatpush1.msra.mxu0 0.0
        %665 = vmatprep.subr.mxu0 0.0
        %666 = vmatpush1.msra.mxu0 0.0
        %667 = vmatprep.subr.mxu0 0.0
        %668 = vmatpush1.msra.mxu0 0.0
        %669 = vmatprep.subr.mxu0 0.0
        %670 = vmatpush1.msra.mxu0 0.0
        %671 = vmatprep.subr.mxu0 0.0
        %672 = vmatpush1.msra.mxu0 0.0
        %673 = vmatprep.subr.mxu0 0.0
        %674 = vmatpush1.msra.mxu0 0.0
        %675 = vmatprep.subr.mxu0 0.0
        %676 = vmatpush1.msra.mxu0 0.0
        %677 = vmatprep.subr.mxu0 0.0
        %678 = vmatpush1.msra.mxu0 0.0
        %679 = vmatprep.subr.mxu0 0.0
        %680 = vmatpush1.msra.mxu0 0.0
        %681 = vmatprep.subr.mxu0 0.0
        %682 = vmatpush1.msra.mxu0 0.0
        %683 = vmatprep.subr.mxu0 0.0
        %684 = vmatpush1.msra.mxu0 0.0
        %685 = vmatprep.subr.mxu0 0.0
        %686 = vmatpush1.msra.mxu0 0.0
        %687 = vmatprep.subr.mxu0 0.0
        %688 = vmatpush1.msra.mxu0 0.0
        %689 = vmatprep.subr.mxu0 0.0
        %v690 = vand.u32 %v240, 4294901760
        %691 = vmatpush1.msra.mxu0 %v690
        %692 = vmatprep.subr.mxu0 0.0
        %693 = vmatpush2.msra.mxu0 0.0
        %694 = vmatprep.subr.mxu0 0.0
        %695 = vmatpush2.msra.mxu0 0.0
        %696 = vmatprep.subr.mxu0 0.0
        %697 = vmatpush2.msra.mxu0 0.0
        %698 = vmatprep.subr.mxu0 0.0
        %699 = vmatpush2.msra.mxu0 0.0
        %700 = vmatprep.subr.mxu0 0.0
        %701 = vmatpush2.msra.mxu0 0.0
        %702 = vmatprep.subr.mxu0 0.0
        %703 = vmatpush2.msra.mxu0 0.0
        %704 = vmatprep.subr.mxu0 0.0
        %705 = vmatpush2.msra.mxu0 0.0
        %706 = vmatprep.subr.mxu0 0.0
        %707 = vmatpush2.msra.mxu0 0.0
        %708 = vmatprep.subr.mxu0 0.0
        %709 = vmatpush2.msra.mxu0 0.0
        %710 = vmatprep.subr.mxu0 0.0
        %711 = vmatpush2.msra.mxu0 0.0
        %712 = vmatprep.subr.mxu0 0.0
        %713 = vmatpush2.msra.mxu0 0.0
        %714 = vmatprep.subr.mxu0 0.0
        %715 = vmatpush2.msra.mxu0 0.0
        %716 = vmatprep.subr.mxu0 0.0
        %717 = vmatpush2.msra.mxu0 0.0
        %718 = vmatprep.subr.mxu0 0.0
        %719 = vmatpush2.msra.mxu0 0.0
        %720 = vmatprep.subr.mxu0 0.0
        %721 = vmatpush2.msra.mxu0 0.0
        %722 = vmatprep.subr.mxu0 0.0
        %723 = vmatpush2.msra.mxu0 0.0
        %724 = vmatprep.mubr.f32.mxu0 0.0
        %v725 = vand.u32 %v243, 4294901760
        %726 = vmatmul.mubr.f32.gmra.mxu0 %v725
        %v727 = vpop.f32.mrf.mxu0
        %v728 = vadd.f32 %v650, %v727
        %v729 = vpop.f32.mrf.mxu0
        %730 = vmatprep.mubr.f32.mxu0 0.0
        %v731 = vand.u32 %v246, 4294901760
        %732 = vmatmul.mubr.f32.gmra.mxu0 %v731
        %v733 = vpop.f32.mrf.mxu0
        %v734 = vadd.f32 %v656, %v733
        %v735 = vpop.f32.mrf.mxu0
        %736 = vdwg.mxu0
        %vm737 = vcmask 523264
        %v739 = vsel %vm737, %v216, 0
        %v742 = vsel %vm737, %v217, 0
        %744 = vmatprep.subr.mxu0 0.0
        %745 = vmatpush1.msra.mxu0 0.0
        %746 = vmatprep.subr.mxu0 0.0
        %747 = vmatpush1.msra.mxu0 0.0
        %748 = vmatprep.subr.mxu0 0.0
        %749 = vmatpush1.msra.mxu0 0.0
        %750 = vmatprep.subr.mxu0 0.0
        %751 = vmatpush1.msra.mxu0 0.0
        %752 = vmatprep.subr.mxu0 0.0
        %753 = vmatpush1.msra.mxu0 0.0
        %754 = vmatprep.subr.mxu0 0.0
        %755 = vmatpush1.msra.mxu0 0.0
        %756 = vmatprep.subr.mxu0 0.0
        %757 = vmatpush1.msra.mxu0 0.0
        %758 = vmatprep.subr.mxu0 0.0
        %759 = vmatpush1.msra.mxu0 0.0
        %760 = vmatprep.subr.mxu0 0.0
        %v761 = vand.u32 %v225, 4294901760
        %762 = vmatpush1.msra.mxu0 %v761
        %763 = vmatprep.subr.mxu0 0.0
        %v764 = vand.u32 %v224, 4294901760
        %765 = vmatpush1.msra.mxu0 %v764
        %766 = vmatprep.subr.mxu0 0.0
        %v767 = vand.u32 %v223, 4294901760
        %768 = vmatpush1.msra.mxu0 %v767
        %769 = vmatprep.subr.mxu0 0.0
        %v770 = vand.u32 %v222, 4294901760
        %771 = vmatpush1.msra.mxu0 %v770
        %772 = vmatprep.subr.mxu0 0.0
        %v773 = vand.u32 %v221, 4294901760
        %774 = vmatpush1.msra.mxu0 %v773
        %775 = vmatprep.subr.mxu0 0.0
        %v776 = vand.u32 %v220, 4294901760
        %777 = vmatpush1.msra.mxu0 %v776
        %778 = vmatprep.subr.mxu0 0.0
        %v779 = vand.u32 %v219, 4294901760
        %780 = vmatpush1.msra.mxu0 %v779
        %781 = vmatprep.subr.mxu0 0.0
        %v782 = vand.u32 %v218, 4294901760
        %783 = vmatpush1.msra.mxu0 %v782
        %784 = vmatprep.subr.mxu0 0.0
        %785 = vmatpush2.msra.mxu0 0.0
        %786 = vmatprep.subr.mxu0 0.0
        %787 = vmatpush2.msra.mxu0 0.0
        %788 = vmatprep.subr.mxu0 0.0
        %789 = vmatpush2.msra.mxu0 0.0
        %790 = vmatprep.subr.mxu0 0.0
        %791 = vmatpush2.msra.mxu0 0.0
        %792 = vmatprep.subr.mxu0 0.0
        %793 = vmatpush2.msra.mxu0 0.0
        %794 = vmatprep.subr.mxu0 0.0
        %795 = vmatpush2.msra.mxu0 0.0
        %796 = vmatprep.subr.mxu0 0.0
        %797 = vmatpush2.msra.mxu0 0.0
        %798 = vmatprep.subr.mxu0 0.0
        %799 = vmatpush2.msra.mxu0 0.0
        %800 = vmatprep.subr.mxu0 0.0
        %801 = vmatpush2.msra.mxu0 0.0
        %802 = vmatprep.subr.mxu0 0.0
        %803 = vmatpush2.msra.mxu0 0.0
        %804 = vmatprep.subr.mxu0 0.0
        %805 = vmatpush2.msra.mxu0 0.0
        %806 = vmatprep.subr.mxu0 0.0
        %807 = vmatpush2.msra.mxu0 0.0
        %808 = vmatprep.subr.mxu0 0.0
        %809 = vmatpush2.msra.mxu0 0.0
        %810 = vmatprep.subr.mxu0 0.0
        %811 = vmatpush2.msra.mxu0 0.0
        %812 = vmatprep.subr.mxu0 0.0
        %813 = vmatpush2.msra.mxu0 0.0
        %814 = vmatprep.subr.mxu0 0.0
        %815 = vmatpush2.msra.mxu0 0.0
        %816 = vmatprep.mubr.f32.mxu0 0.0
        %v817 = vand.u32 %v739, 4294901760
        %v818 = vsub.f32 %v739, %v817
        %v819 = vand.u32 %v818, 4294901760
        %v820 = vsub.f32 %v818, %v819
        %v821 = vand.u32 %v820, 4294901760
        %822 = vmatmul.mubr.f32.gmra.mxu0 %v821
        %v823 = vpop.f32.mrf.mxu0
        %v824 = vadd.f32 %v728, %v823
        %v825 = vpop.f32.mrf.mxu0
        %826 = vmatprep.mubr.f32.mxu0 0.0
        %v827 = vand.u32 %v742, 4294901760
        %v828 = vsub.f32 %v742, %v827
        %v829 = vand.u32 %v828, 4294901760
        %v830 = vsub.f32 %v828, %v829
        %v831 = vand.u32 %v830, 4294901760
        %832 = vmatmul.mubr.f32.gmra.mxu0 %v831
        %v833 = vpop.f32.mrf.mxu0
        %v834 = vadd.f32 %v734, %v833
        %v835 = vpop.f32.mrf.mxu0
        %836 = vdwg.mxu0
        %837 = vmatprep.subr.mxu0 0.0
        %838 = vmatpush1.msra.mxu0 0.0
        %839 = vmatprep.subr.mxu0 0.0
        %840 = vmatpush1.msra.mxu0 0.0
        %841 = vmatprep.subr.mxu0 0.0
        %842 = vmatpush1.msra.mxu0 0.0
        %843 = vmatprep.subr.mxu0 0.0
        %844 = vmatpush1.msra.mxu0 0.0
        %845 = vmatprep.subr.mxu0 0.0
        %846 = vmatpush1.msra.mxu0 0.0
        %847 = vmatprep.subr.mxu0 0.0
        %848 = vmatpush1.msra.mxu0 0.0
        %849 = vmatprep.subr.mxu0 0.0
        %850 = vmatpush1.msra.mxu0 0.0
        %851 = vmatprep.subr.mxu0 0.0
        %852 = vmatpush1.msra.mxu0 0.0
        %853 = vmatprep.subr.mxu0 0.0
        %v854 = vand.u32 %v225, 4294901760
        %v855 = vsub.f32 %v225, %v854
        %v856 = vand.u32 %v855, 4294901760
        %v857 = vsub.f32 %v855, %v856
        %v858 = vand.u32 %v857, 4294901760
        %859 = vmatpush1.msra.mxu0 %v858
        %860 = vmatprep.subr.mxu0 0.0
        %v861 = vand.u32 %v224, 4294901760
        %v862 = vsub.f32 %v224, %v861
        %v863 = vand.u32 %v862, 4294901760
        %v864 = vsub.f32 %v862, %v863
        %v865 = vand.u32 %v864, 4294901760
        %866 = vmatpush1.msra.mxu0 %v865
        %867 = vmatprep.subr.mxu0 0.0
        %v868 = vand.u32 %v223, 4294901760
        %v869 = vsub.f32 %v223, %v868
        %v870 = vand.u32 %v869, 4294901760
        %v871 = vsub.f32 %v869, %v870
        %v872 = vand.u32 %v871, 4294901760
        %873 = vmatpush1.msra.mxu0 %v872
        %874 = vmatprep.subr.mxu0 0.0
        %v875 = vand.u32 %v222, 4294901760
        %v876 = vsub.f32 %v222, %v875
        %v877 = vand.u32 %v876, 4294901760
        %v878 = vsub.f32 %v876, %v877
        %v879 = vand.u32 %v878, 4294901760
        %880 = vmatpush1.msra.mxu0 %v879
        %881 = vmatprep.subr.mxu0 0.0
        %v882 = vand.u32 %v221, 4294901760
        %v883 = vsub.f32 %v221, %v882
        %v884 = vand.u32 %v883, 4294901760
        %v885 = vsub.f32 %v883, %v884
        %v886 = vand.u32 %v885, 4294901760
        %887 = vmatpush1.msra.mxu0 %v886
        %888 = vmatprep.subr.mxu0 0.0
        %v889 = vand.u32 %v220, 4294901760
        %v890 = vsub.f32 %v220, %v889
        %v891 = vand.u32 %v890, 4294901760
        %v892 = vsub.f32 %v890, %v891
        %v893 = vand.u32 %v892, 4294901760
        %894 = vmatpush1.msra.mxu0 %v893
        %895 = vmatprep.subr.mxu0 0.0
        %v896 = vand.u32 %v219, 4294901760
        %v897 = vsub.f32 %v219, %v896
        %v898 = vand.u32 %v897, 4294901760
        %v899 = vsub.f32 %v897, %v898
        %v900 = vand.u32 %v899, 4294901760
        %901 = vmatpush1.msra.mxu0 %v900
        %902 = vmatprep.subr.mxu0 0.0
        %v903 = vand.u32 %v218, 4294901760
        %v904 = vsub.f32 %v218, %v903
        %v905 = vand.u32 %v904, 4294901760
        %v906 = vsub.f32 %v904, %v905
        %v907 = vand.u32 %v906, 4294901760
        %908 = vmatpush1.msra.mxu0 %v907
        %909 = vmatprep.subr.mxu0 0.0
        %910 = vmatpush2.msra.mxu0 0.0
        %911 = vmatprep.subr.mxu0 0.0
        %912 = vmatpush2.msra.mxu0 0.0
        %913 = vmatprep.subr.mxu0 0.0
        %914 = vmatpush2.msra.mxu0 0.0
        %915 = vmatprep.subr.mxu0 0.0
        %916 = vmatpush2.msra.mxu0 0.0
        %917 = vmatprep.subr.mxu0 0.0
        %918 = vmatpush2.msra.mxu0 0.0
        %919 = vmatprep.subr.mxu0 0.0
        %920 = vmatpush2.msra.mxu0 0.0
        %921 = vmatprep.subr.mxu0 0.0
        %922 = vmatpush2.msra.mxu0 0.0
        %923 = vmatprep.subr.mxu0 0.0
        %924 = vmatpush2.msra.mxu0 0.0
        %925 = vmatprep.subr.mxu0 0.0
        %926 = vmatpush2.msra.mxu0 0.0
        %927 = vmatprep.subr.mxu0 0.0
        %928 = vmatpush2.msra.mxu0 0.0
        %929 = vmatprep.subr.mxu0 0.0
        %930 = vmatpush2.msra.mxu0 0.0
        %931 = vmatprep.subr.mxu0 0.0
        %932 = vmatpush2.msra.mxu0 0.0
        %933 = vmatprep.subr.mxu0 0.0
        %934 = vmatpush2.msra.mxu0 0.0
        %935 = vmatprep.subr.mxu0 0.0
        %936 = vmatpush2.msra.mxu0 0.0
        %937 = vmatprep.subr.mxu0 0.0
        %938 = vmatpush2.msra.mxu0 0.0
        %939 = vmatprep.subr.mxu0 0.0
        %940 = vmatpush2.msra.mxu0 0.0
        %941 = vmatprep.mubr.f32.mxu0 0.0
        %v942 = vand.u32 %v739, 4294901760
        %943 = vmatmul.mubr.f32.gmra.mxu0 %v942
        %v944 = vpop.f32.mrf.mxu0
        %v945 = vadd.f32 %v824, %v944
        %v946 = vpop.f32.mrf.mxu0
        %947 = vmatprep.mubr.f32.mxu0 0.0
        %v948 = vand.u32 %v742, 4294901760
        %949 = vmatmul.mubr.f32.gmra.mxu0 %v948
        %v950 = vpop.f32.mrf.mxu0
        %v951 = vadd.f32 %v834, %v950
        %v952 = vpop.f32.mrf.mxu0
        %953 = vdwg.mxu0
        %954 = vmatprep.subr.mxu0 0.0
        %955 = vmatpush1.msra.mxu0 0.0
        %956 = vmatprep.subr.mxu0 0.0
        %957 = vmatpush1.msra.mxu0 0.0
        %958 = vmatprep.subr.mxu0 0.0
        %959 = vmatpush1.msra.mxu0 0.0
        %960 = vmatprep.subr.mxu0 0.0
        %961 = vmatpush1.msra.mxu0 0.0
        %962 = vmatprep.subr.mxu0 0.0
        %963 = vmatpush1.msra.mxu0 0.0
        %964 = vmatprep.subr.mxu0 0.0
        %965 = vmatpush1.msra.mxu0 0.0
        %966 = vmatprep.subr.mxu0 0.0
        %967 = vmatpush1.msra.mxu0 0.0
        %968 = vmatprep.subr.mxu0 0.0
        %969 = vmatpush1.msra.mxu0 0.0
        %970 = vmatprep.subr.mxu0 0.0
        %v971 = vand.u32 %v225, 4294901760
        %v972 = vsub.f32 %v225, %v971
        %973 = vmatpush1.msra.mxu0 %v972
        %974 = vmatprep.subr.mxu0 0.0
        %v975 = vand.u32 %v224, 4294901760
        %v976 = vsub.f32 %v224, %v975
        %977 = vmatpush1.msra.mxu0 %v976
        %978 = vmatprep.subr.mxu0 0.0
        %v979 = vand.u32 %v223, 4294901760
        %v980 = vsub.f32 %v223, %v979
        %981 = vmatpush1.msra.mxu0 %v980
        %982 = vmatprep.subr.mxu0 0.0
        %v983 = vand.u32 %v222, 4294901760
        %v984 = vsub.f32 %v222, %v983
        %985 = vmatpush1.msra.mxu0 %v984
        %986 = vmatprep.subr.mxu0 0.0
        %v987 = vand.u32 %v221, 4294901760
        %v988 = vsub.f32 %v221, %v987
        %989 = vmatpush1.msra.mxu0 %v988
        %990 = vmatprep.subr.mxu0 0.0
        %v991 = vand.u32 %v220, 4294901760
        %v992 = vsub.f32 %v220, %v991
        %993 = vmatpush1.msra.mxu0 %v992
        %994 = vmatprep.subr.mxu0 0.0
        %v995 = vand.u32 %v219, 4294901760
        %v996 = vsub.f32 %v219, %v995
        %997 = vmatpush1.msra.mxu0 %v996
        %998 = vmatprep.subr.mxu0 0.0
        %v999 = vand.u32 %v218, 4294901760
        %v1000 = vsub.f32 %v218, %v999
        %1001 = vmatpush1.msra.mxu0 %v1000
        %1002 = vmatprep.subr.mxu0 0.0
        %1003 = vmatpush2.msra.mxu0 0.0
        %1004 = vmatprep.subr.mxu0 0.0
        %1005 = vmatpush2.msra.mxu0 0.0
        %1006 = vmatprep.subr.mxu0 0.0
        %1007 = vmatpush2.msra.mxu0 0.0
        %1008 = vmatprep.subr.mxu0 0.0
        %1009 = vmatpush2.msra.mxu0 0.0
        %1010 = vmatprep.subr.mxu0 0.0
        %1011 = vmatpush2.msra.mxu0 0.0
        %1012 = vmatprep.subr.mxu0 0.0
        %1013 = vmatpush2.msra.mxu0 0.0
        %1014 = vmatprep.subr.mxu0 0.0
        %1015 = vmatpush2.msra.mxu0 0.0
        %1016 = vmatprep.subr.mxu0 0.0
        %1017 = vmatpush2.msra.mxu0 0.0
        %1018 = vmatprep.subr.mxu0 0.0
        %1019 = vmatpush2.msra.mxu0 0.0
        %1020 = vmatprep.subr.mxu0 0.0
        %1021 = vmatpush2.msra.mxu0 0.0
        %1022 = vmatprep.subr.mxu0 0.0
        %1023 = vmatpush2.msra.mxu0 0.0
        %1024 = vmatprep.subr.mxu0 0.0
        %1025 = vmatpush2.msra.mxu0 0.0
        %1026 = vmatprep.subr.mxu0 0.0
        %1027 = vmatpush2.msra.mxu0 0.0
        %1028 = vmatprep.subr.mxu0 0.0
        %1029 = vmatpush2.msra.mxu0 0.0
        %1030 = vmatprep.subr.mxu0 0.0
        %1031 = vmatpush2.msra.mxu0 0.0
        %1032 = vmatprep.subr.mxu0 0.0
        %1033 = vmatpush2.msra.mxu0 0.0
        %1034 = vmatprep.mubr.f32.mxu0 0.0
        %v1035 = vand.u32 %v739, 4294901760
        %v1036 = vsub.f32 %v739, %v1035
        %1037 = vmatmul.mubr.f32.gmra.mxu0 %v1036
        %v1038 = vpop.f32.mrf.mxu0
        %v1039 = vadd.f32 %v945, %v1038
        %v1040 = vpop.f32.mrf.mxu0
        %1041 = vmatprep.mubr.f32.mxu0 0.0
        %v1042 = vand.u32 %v742, 4294901760
        %v1043 = vsub.f32 %v742, %v1042
        %1044 = vmatmul.mubr.f32.gmra.mxu0 %v1043
        %v1045 = vpop.f32.mrf.mxu0
        %v1046 = vadd.f32 %v951, %v1045
        %v1047 = vpop.f32.mrf.mxu0
        %1048 = vdwg.mxu0
        %1049 = vmatprep.subr.mxu0 0.0
        %1050 = vmatpush1.msra.mxu0 0.0
        %1051 = vmatprep.subr.mxu0 0.0
        %1052 = vmatpush1.msra.mxu0 0.0
        %1053 = vmatprep.subr.mxu0 0.0
        %1054 = vmatpush1.msra.mxu0 0.0
        %1055 = vmatprep.subr.mxu0 0.0
        %1056 = vmatpush1.msra.mxu0 0.0
        %1057 = vmatprep.subr.mxu0 0.0
        %1058 = vmatpush1.msra.mxu0 0.0
        %1059 = vmatprep.subr.mxu0 0.0
        %1060 = vmatpush1.msra.mxu0 0.0
        %1061 = vmatprep.subr.mxu0 0.0
        %1062 = vmatpush1.msra.mxu0 0.0
        %1063 = vmatprep.subr.mxu0 0.0
        %1064 = vmatpush1.msra.mxu0 0.0
        %1065 = vmatprep.subr.mxu0 0.0
        %v1066 = vand.u32 %v225, 4294901760
        %1067 = vmatpush1.msra.mxu0 %v1066
        %1068 = vmatprep.subr.mxu0 0.0
        %v1069 = vand.u32 %v224, 4294901760
        %1070 = vmatpush1.msra.mxu0 %v1069
        %1071 = vmatprep.subr.mxu0 0.0
        %v1072 = vand.u32 %v223, 4294901760
        %1073 = vmatpush1.msra.mxu0 %v1072
        %1074 = vmatprep.subr.mxu0 0.0
        %v1075 = vand.u32 %v222, 4294901760
        %1076 = vmatpush1.msra.mxu0 %v1075
        %1077 = vmatprep.subr.mxu0 0.0
        %v1078 = vand.u32 %v221, 4294901760
        %1079 = vmatpush1.msra.mxu0 %v1078
        %1080 = vmatprep.subr.mxu0 0.0
        %v1081 = vand.u32 %v220, 4294901760
        %1082 = vmatpush1.msra.mxu0 %v1081
        %1083 = vmatprep.subr.mxu0 0.0
        %v1084 = vand.u32 %v219, 4294901760
        %1085 = vmatpush1.msra.mxu0 %v1084
        %1086 = vmatprep.subr.mxu0 0.0
        %v1087 = vand.u32 %v218, 4294901760
        %1088 = vmatpush1.msra.mxu0 %v1087
        %1089 = vmatprep.subr.mxu0 0.0
        %1090 = vmatpush2.msra.mxu0 0.0
        %1091 = vmatprep.subr.mxu0 0.0
        %1092 = vmatpush2.msra.mxu0 0.0
        %1093 = vmatprep.subr.mxu0 0.0
        %1094 = vmatpush2.msra.mxu0 0.0
        %1095 = vmatprep.subr.mxu0 0.0
        %1096 = vmatpush2.msra.mxu0 0.0
        %1097 = vmatprep.subr.mxu0 0.0
        %1098 = vmatpush2.msra.mxu0 0.0
        %1099 = vmatprep.subr.mxu0 0.0
        %1100 = vmatpush2.msra.mxu0 0.0
        %1101 = vmatprep.subr.mxu0 0.0
        %1102 = vmatpush2.msra.mxu0 0.0
        %1103 = vmatprep.subr.mxu0 0.0
        %1104 = vmatpush2.msra.mxu0 0.0
        %1105 = vmatprep.subr.mxu0 0.0
        %1106 = vmatpush2.msra.mxu0 0.0
        %1107 = vmatprep.subr.mxu0 0.0
        %1108 = vmatpush2.msra.mxu0 0.0
        %1109 = vmatprep.subr.mxu0 0.0
        %1110 = vmatpush2.msra.mxu0 0.0
        %1111 = vmatprep.subr.mxu0 0.0
        %1112 = vmatpush2.msra.mxu0 0.0
        %1113 = vmatprep.subr.mxu0 0.0
        %1114 = vmatpush2.msra.mxu0 0.0
        %1115 = vmatprep.subr.mxu0 0.0
        %1116 = vmatpush2.msra.mxu0 0.0
        %1117 = vmatprep.subr.mxu0 0.0
        %1118 = vmatpush2.msra.mxu0 0.0
        %1119 = vmatprep.subr.mxu0 0.0
        %1120 = vmatpush2.msra.mxu0 0.0
        %1121 = vmatprep.mubr.f32.mxu0 0.0
        %v1122 = vand.u32 %v739, 4294901760
        %v1123 = vsub.f32 %v739, %v1122
        %v1124 = vand.u32 %v1123, 4294901760
        %1125 = vmatmul.mubr.f32.gmra.mxu0 %v1124
        %v1126 = vpop.f32.mrf.mxu0
        %v1127 = vadd.f32 %v1039, %v1126
        %v1128 = vpop.f32.mrf.mxu0
        %1129 = vmatprep.mubr.f32.mxu0 0.0
        %v1130 = vand.u32 %v742, 4294901760
        %v1131 = vsub.f32 %v742, %v1130
        %v1132 = vand.u32 %v1131, 4294901760
        %1133 = vmatmul.mubr.f32.gmra.mxu0 %v1132
        %v1134 = vpop.f32.mrf.mxu0
        %v1135 = vadd.f32 %v1046, %v1134
        %v1136 = vpop.f32.mrf.mxu0
        %1137 = vdwg.mxu0
        %1138 = vmatprep.subr.mxu0 0.0
        %1139 = vmatpush1.msra.mxu0 0.0
        %1140 = vmatprep.subr.mxu0 0.0
        %1141 = vmatpush1.msra.mxu0 0.0
        %1142 = vmatprep.subr.mxu0 0.0
        %1143 = vmatpush1.msra.mxu0 0.0
        %1144 = vmatprep.subr.mxu0 0.0
        %1145 = vmatpush1.msra.mxu0 0.0
        %1146 = vmatprep.subr.mxu0 0.0
        %1147 = vmatpush1.msra.mxu0 0.0
        %1148 = vmatprep.subr.mxu0 0.0
        %1149 = vmatpush1.msra.mxu0 0.0
        %1150 = vmatprep.subr.mxu0 0.0
        %1151 = vmatpush1.msra.mxu0 0.0
        %1152 = vmatprep.subr.mxu0 0.0
        %1153 = vmatpush1.msra.mxu0 0.0
        %1154 = vmatprep.subr.mxu0 0.0
        %v1155 = vand.u32 %v225, 4294901760
        %v1156 = vsub.f32 %v225, %v1155
        %v1157 = vand.u32 %v1156, 4294901760
        %1158 = vmatpush1.msra.mxu0 %v1157
        %1159 = vmatprep.subr.mxu0 0.0
        %v1160 = vand.u32 %v224, 4294901760
        %v1161 = vsub.f32 %v224, %v1160
        %v1162 = vand.u32 %v1161, 4294901760
        %1163 = vmatpush1.msra.mxu0 %v1162
        %1164 = vmatprep.subr.mxu0 0.0
        %v1165 = vand.u32 %v223, 4294901760
        %v1166 = vsub.f32 %v223, %v1165
        %v1167 = vand.u32 %v1166, 4294901760
        %1168 = vmatpush1.msra.mxu0 %v1167
        %1169 = vmatprep.subr.mxu0 0.0
        %v1170 = vand.u32 %v222, 4294901760
        %v1171 = vsub.f32 %v222, %v1170
        %v1172 = vand.u32 %v1171, 4294901760
        %1173 = vmatpush1.msra.mxu0 %v1172
        %1174 = vmatprep.subr.mxu0 0.0
        %v1175 = vand.u32 %v221, 4294901760
        %v1176 = vsub.f32 %v221, %v1175
        %v1177 = vand.u32 %v1176, 4294901760
        %1178 = vmatpush1.msra.mxu0 %v1177
        %1179 = vmatprep.subr.mxu0 0.0
        %v1180 = vand.u32 %v220, 4294901760
        %v1181 = vsub.f32 %v220, %v1180
        %v1182 = vand.u32 %v1181, 4294901760
        %1183 = vmatpush1.msra.mxu0 %v1182
        %1184 = vmatprep.subr.mxu0 0.0
        %v1185 = vand.u32 %v219, 4294901760
        %v1186 = vsub.f32 %v219, %v1185
        %v1187 = vand.u32 %v1186, 4294901760
        %1188 = vmatpush1.msra.mxu0 %v1187
        %1189 = vmatprep.subr.mxu0 0.0
        %v1190 = vand.u32 %v218, 4294901760
        %v1191 = vsub.f32 %v218, %v1190
        %v1192 = vand.u32 %v1191, 4294901760
        %1193 = vmatpush1.msra.mxu0 %v1192
        %1194 = vmatprep.subr.mxu0 0.0
        %1195 = vmatpush2.msra.mxu0 0.0
        %1196 = vmatprep.subr.mxu0 0.0
        %1197 = vmatpush2.msra.mxu0 0.0
        %1198 = vmatprep.subr.mxu0 0.0
        %1199 = vmatpush2.msra.mxu0 0.0
        %1200 = vmatprep.subr.mxu0 0.0
        %1201 = vmatpush2.msra.mxu0 0.0
        %1202 = vmatprep.subr.mxu0 0.0
        %1203 = vmatpush2.msra.mxu0 0.0
        %1204 = vmatprep.subr.mxu0 0.0
        %1205 = vmatpush2.msra.mxu0 0.0
        %1206 = vmatprep.subr.mxu0 0.0
        %1207 = vmatpush2.msra.mxu0 0.0
        %1208 = vmatprep.subr.mxu0 0.0
        %1209 = vmatpush2.msra.mxu0 0.0
        %1210 = vmatprep.subr.mxu0 0.0
        %1211 = vmatpush2.msra.mxu0 0.0
        %1212 = vmatprep.subr.mxu0 0.0
        %1213 = vmatpush2.msra.mxu0 0.0
        %1214 = vmatprep.subr.mxu0 0.0
        %1215 = vmatpush2.msra.mxu0 0.0
        %1216 = vmatprep.subr.mxu0 0.0
        %1217 = vmatpush2.msra.mxu0 0.0
        %1218 = vmatprep.subr.mxu0 0.0
        %1219 = vmatpush2.msra.mxu0 0.0
        %1220 = vmatprep.subr.mxu0 0.0
        %1221 = vmatpush2.msra.mxu0 0.0
        %1222 = vmatprep.subr.mxu0 0.0
        %1223 = vmatpush2.msra.mxu0 0.0
        %1224 = vmatprep.subr.mxu0 0.0
        %1225 = vmatpush2.msra.mxu0 0.0
        %1226 = vmatprep.mubr.f32.mxu0 0.0
        %v1227 = vand.u32 %v739, 4294901760
        %1228 = vmatmul.mubr.f32.gmra.mxu0 %v1227
        %v1229 = vpop.f32.mrf.mxu0
        %v1230 = vadd.f32 %v1127, %v1229
        %v1231 = vpop.f32.mrf.mxu0
        %1232 = vmatprep.mubr.f32.mxu0 0.0
        %v1233 = vand.u32 %v742, 4294901760
        %1234 = vmatmul.mubr.f32.gmra.mxu0 %v1233
        %v1235 = vpop.f32.mrf.mxu0
        %v1236 = vadd.f32 %v1135, %v1235
        %v1237 = vpop.f32.mrf.mxu0
        %1238 = vdwg.mxu0
        %1239 = vmatprep.subr.mxu0 0.0
        %1240 = vmatpush1.msra.mxu0 0.0
        %1241 = vmatprep.subr.mxu0 0.0
        %1242 = vmatpush1.msra.mxu0 0.0
        %1243 = vmatprep.subr.mxu0 0.0
        %1244 = vmatpush1.msra.mxu0 0.0
        %1245 = vmatprep.subr.mxu0 0.0
        %1246 = vmatpush1.msra.mxu0 0.0
        %1247 = vmatprep.subr.mxu0 0.0
        %1248 = vmatpush1.msra.mxu0 0.0
        %1249 = vmatprep.subr.mxu0 0.0
        %1250 = vmatpush1.msra.mxu0 0.0
        %1251 = vmatprep.subr.mxu0 0.0
        %1252 = vmatpush1.msra.mxu0 0.0
        %1253 = vmatprep.subr.mxu0 0.0
        %1254 = vmatpush1.msra.mxu0 0.0
        %1255 = vmatprep.subr.mxu0 0.0
        %v1256 = vand.u32 %v225, 4294901760
        %1257 = vmatpush1.msra.mxu0 %v1256
        %1258 = vmatprep.subr.mxu0 0.0
        %v1259 = vand.u32 %v224, 4294901760
        %1260 = vmatpush1.msra.mxu0 %v1259
        %1261 = vmatprep.subr.mxu0 0.0
        %v1262 = vand.u32 %v223, 4294901760
        %1263 = vmatpush1.msra.mxu0 %v1262
        %1264 = vmatprep.subr.mxu0 0.0
        %v1265 = vand.u32 %v222, 4294901760
        %1266 = vmatpush1.msra.mxu0 %v1265
        %1267 = vmatprep.subr.mxu0 0.0
        %v1268 = vand.u32 %v221, 4294901760
        %1269 = vmatpush1.msra.mxu0 %v1268
        %1270 = vmatprep.subr.mxu0 0.0
        %v1271 = vand.u32 %v220, 4294901760
        %1272 = vmatpush1.msra.mxu0 %v1271
        %1273 = vmatprep.subr.mxu0 0.0
        %v1274 = vand.u32 %v219, 4294901760
        %1275 = vmatpush1.msra.mxu0 %v1274
        %1276 = vmatprep.subr.mxu0 0.0
        %v1277 = vand.u32 %v218, 4294901760
        %1278 = vmatpush1.msra.mxu0 %v1277
        %1279 = vmatprep.subr.mxu0 0.0
        %1280 = vmatpush2.msra.mxu0 0.0
        %1281 = vmatprep.subr.mxu0 0.0
        %1282 = vmatpush2.msra.mxu0 0.0
        %1283 = vmatprep.subr.mxu0 0.0
        %1284 = vmatpush2.msra.mxu0 0.0
        %1285 = vmatprep.subr.mxu0 0.0
        %1286 = vmatpush2.msra.mxu0 0.0
        %1287 = vmatprep.subr.mxu0 0.0
        %1288 = vmatpush2.msra.mxu0 0.0
        %1289 = vmatprep.subr.mxu0 0.0
        %1290 = vmatpush2.msra.mxu0 0.0
        %1291 = vmatprep.subr.mxu0 0.0
        %1292 = vmatpush2.msra.mxu0 0.0
        %1293 = vmatprep.subr.mxu0 0.0
        %1294 = vmatpush2.msra.mxu0 0.0
        %1295 = vmatprep.subr.mxu0 0.0
        %1296 = vmatpush2.msra.mxu0 0.0
        %1297 = vmatprep.subr.mxu0 0.0
        %1298 = vmatpush2.msra.mxu0 0.0
        %1299 = vmatprep.subr.mxu0 0.0
        %1300 = vmatpush2.msra.mxu0 0.0
        %1301 = vmatprep.subr.mxu0 0.0
        %1302 = vmatpush2.msra.mxu0 0.0
        %1303 = vmatprep.subr.mxu0 0.0
        %1304 = vmatpush2.msra.mxu0 0.0
        %1305 = vmatprep.subr.mxu0 0.0
        %1306 = vmatpush2.msra.mxu0 0.0
        %1307 = vmatprep.subr.mxu0 0.0
        %1308 = vmatpush2.msra.mxu0 0.0
        %1309 = vmatprep.subr.mxu0 0.0
        %1310 = vmatpush2.msra.mxu0 0.0
        %1311 = vmatprep.mubr.f32.mxu0 0.0
        %v1312 = vand.u32 %v739, 4294901760
        %1313 = vmatmul.mubr.f32.gmra.mxu0 %v1312
        %v1314 = vpop.f32.mrf.mxu0
        %v1315 = vadd.f32 %v1230, %v1314
        %v1316 = vpop.f32.mrf.mxu0
        %1317 = vmatprep.mubr.f32.mxu0 0.0
        %v1318 = vand.u32 %v742, 4294901760
        %1319 = vmatmul.mubr.f32.gmra.mxu0 %v1318
        %v1320 = vpop.f32.mrf.mxu0
        %v1321 = vadd.f32 %v1236, %v1320
        %v1322 = vpop.f32.mrf.mxu0
        %1323 = vdwg.mxu0
        %1324 = vst [vmem:[%s192] sm:$0xff] %v1315
        %1325 = vst [vmem:[%s192 + $0x8] sm:$0xff] %v1321
        %s1326 = sand.u32 %s99, 1
        %s1327 = scalar_lea.sflag [#allocation4], %s1326
        %s1328 = sand.u32 %s99, 1
        %s1329 = smul.addr %s1328, 16
        %s1330 = scalar_lea.vmem [#allocation5], %s1329
        // Predicated region
        $region37: #{tpu_custom_call.1} parent=31 // pred_check
          %p1331 = pneg %p109
        $region38: #{tpu_custom_call.1} parent=31 // pred_check_branch
          %1333 = sbr.rel (%p1331) target = $region40
        $region39: #{tpu_custom_call.1} parent=31 // pred_region
          %s1334 = smul.u32 2, %s18
          %s1336 = ssub.s32 256, 256
          %1337 = vsyncadd %s1327, %s1336
          %s1338 = smul.addr %s1334, 128
          %s1339 = scalar_lea.hbm %s3, %s1338
          %s1340 = sshll.u32 %s1330, 4
          %s1341 = int_to_ptr.vmem [resolvable:$true] %s1340
          %1346 = dma.vmem_to_hbm [thread:$0]  %s1341, 256, %s1339, %s1327, 128, 128, 8
        $region40: #{tpu_custom_call.1} parent=31 // pred_fallthru
          _
      $region32: #{tpu_custom_call.1} parent=5 // pred_fallthru
        _
      %p1347 = scmp.le.s32.totalorder 2, %s13
      // Predicated region
      $region41: #{tpu_custom_call.1} parent=5 // pred_check
        %p1348 = pneg %p1347
      $region42: #{tpu_custom_call.1} parent=5 // pred_check_branch
        %1350 = sbr.rel (%p1348) target = $region44
      $region43: #{tpu_custom_call.1} parent=5 // pred_region
        %s1351 = ssub.s32 %s13, 2
        // Predicated region
        $region45: #{tpu_custom_call.1} parent=43 // pred_check
          %p1352 = pneg %p115
        $region46: #{tpu_custom_call.1} parent=43 // pred_check_branch
          %1354 = sbr.rel (%p1352) target = $region48
        $region47: #{tpu_custom_call.1} parent=43 // pred_region
          %s1355 = sand.u32 %s100, 1
          %s1356 = scalar_lea.sflag [#allocation4], %s1355
          %s1357 = sand.u32 %s100, 1
          %s1358 = smul.addr %s1357, 16
          %s1359 = scalar_lea.vmem [#allocation5], %s1358
          %1360 = dma.done %s1356, 256
        $region48: #{tpu_custom_call.1} parent=43 // pred_fallthru
          _
      $region44: #{tpu_custom_call.1} parent=5 // pred_fallthru
        _
    $region6: #{tpu_custom_call.1} parent=1 // loop_footer
      %s17 = sadd.s32 1, %s13
    $region7: #{tpu_custom_call.1} parent=1 // loop_footer_branch
      %12 = sbr.rel target = $region3
    $region8: #{tpu_custom_call.1} parent=1 // loop_exit
      _
    %1361 = vsyncpa [#allocation3], 1
    %s1362 = scalar_lea.sflag [#allocation3], 1
    %1363 = vsyncpa %s1362, 1
    %1364 = vsyncpa [#allocation4], 1
    %s1365 = scalar_lea.sflag [#allocation4], 1
    %1366 = vsyncpa %s1365, 1

</llo_original>
